<compile_context>
chip_gen: v7x
topology: tpu7x:2x2x1
jax: 0.10.0
libtpu: 0.0.40
codegen_flags: <defaults>
</compile_context>

<pallas_src>
import functools

import jax
import jax.numpy as jnp
from jax.experimental import pallas as pl
from jax.experimental.pallas import tpu as pltpu

BN_EPS = 1e-5
LAYER_STRIDES = (1, 2, 2, 2)
VMEM_LIMIT = 32 * 1024 * 1024


# ----------------------- matmul (+bias, +BN stats) ----------------------

def _mm_stats_kernel(a_ref, b_ref, bias_ref, o_ref, stats_ref, acc_ref, *, m_total):
    i = pl.program_id(0)
    k = pl.program_id(2)

    @pl.when(k == 0)
    def _():
        # fold the bias into the accumulator init (no epilogue add)
        acc_ref[...] = jnp.broadcast_to(bias_ref[...], acc_ref.shape)

    acc_ref[...] += jnp.dot(a_ref[...], b_ref[...],
                            preferred_element_type=jnp.float32)

    @pl.when(k == pl.num_programs(2) - 1)
    def _():
        acc = acc_ref[...]
        o_ref[...] = acc.astype(o_ref.dtype)
        # Partial batch-norm statistics ride on the resident f32 accumulator
        # (free VPU/XLU work while the kernel is MXU/DMA bound).  Rows past the
        # true M (ragged last block) are masked out so garbage / NaN padding
        # cannot pollute the stats.
        tm = acc.shape[0]
        rows = jax.lax.broadcasted_iota(jnp.int32, acc.shape, 0) + i * tm
        av = jnp.where(rows < m_total, acc, 0.0)
        ssum = jnp.sum(av, axis=0, keepdims=True)
        ssq = jnp.sum(av * av, axis=0, keepdims=True)
        stats_ref[...] = jnp.concatenate([ssum, ssq], axis=0)[None, :, :]


def _mm_kernel(a_ref, b_ref, bias_ref, o_ref, acc_ref):
    k = pl.program_id(2)

    @pl.when(k == 0)
    def _():
        acc_ref[...] = jnp.broadcast_to(bias_ref[...], acc_ref.shape)

    acc_ref[...] += jnp.dot(a_ref[...], b_ref[...],
                            preferred_element_type=jnp.float32)

    @pl.when(k == pl.num_programs(2) - 1)
    def _():
        o_ref[...] = acc_ref[...].astype(o_ref.dtype)


def _pick_tm(M, N):
    if M <= 256:
        return M                           # full-dim block (no ragged M at all)
    if N <= 128 and M >= 512:
        return 512                         # narrow outputs: larger M tile
    return 256


def _pick_tk(K):
    if K <= 1024:
        return K                           # full-K block: no pad, no ragged K
    for cand in (1024, 768, 512, 384, 256, 128):
        if K % cand == 0:
            return cand
    return K


def _pick_tn(N):
    if N <= 512:
        return N                           # full-N block (lane dense, no pad)
    for cand in (512, 384, 256, 128):
        if N % cand == 0:
            return cand
    return N


def _matmul(a, b, bias, out_dtype, with_stats):
    M, K = a.shape
    Kb, N = b.shape
    assert K == Kb
    tm, tk, tn = _pick_tm(M, N), _pick_tk(K), _pick_tn(N)
    gm, gn, gk = pl.cdiv(M, tm), pl.cdiv(N, tn), pl.cdiv(K, tk)

    if bias is None:
        bias = jnp.zeros((N,), jnp.float32)
    bias2d = bias.astype(jnp.float32).reshape(1, N)
    a = a.astype(jnp.bfloat16)
    b = b.astype(jnp.bfloat16)

    in_specs = [
        pl.BlockSpec((tm, tk), lambda i, j, k: (i, k)),
        pl.BlockSpec((tk, tn), lambda i, j, k: (k, j)),
        pl.BlockSpec((1, tn), lambda i, j, k: (0, j)),
    ]
    cparams = pltpu.CompilerParams(
        dimension_semantics=("parallel", "parallel", "arbitrary"),
        vmem_limit_bytes=VMEM_LIMIT)

    if with_stats:
        out, part = pl.pallas_call(
            functools.partial(_mm_stats_kernel, m_total=M),
            out_shape=(jax.ShapeDtypeStruct((M, N), out_dtype),
                       jax.ShapeDtypeStruct((gm, 2, N), jnp.float32)),
            grid_spec=pltpu.PrefetchScalarGridSpec(
                num_scalar_prefetch=0,
                grid=(gm, gn, gk),
                in_specs=in_specs,
                out_specs=(
                    pl.BlockSpec((tm, tn), lambda i, j, k: (i, j)),
                    pl.BlockSpec((1, 2, tn), lambda i, j, k: (i, 0, j)),
                ),
                scratch_shapes=[pltpu.VMEM((tm, tn), jnp.float32)],
            ),
            compiler_params=cparams,
        )(a, b, bias2d)
        return out, part.sum(axis=0)

    out = pl.pallas_call(
        _mm_kernel,
        out_shape=jax.ShapeDtypeStruct((M, N), out_dtype),
        grid_spec=pltpu.PrefetchScalarGridSpec(
            num_scalar_prefetch=0,
            grid=(gm, gn, gk),
            in_specs=in_specs,
            out_specs=pl.BlockSpec((tm, tn), lambda i, j, k: (i, j)),
            scratch_shapes=[pltpu.VMEM((tm, tn), jnp.float32)],
        ),
        compiler_params=cparams,
    )(a, b, bias2d)
    return out


def matmul_bias_stats(a, b, bias=None, out_dtype=jnp.bfloat16):
    """a:[M,K] @ b:[K,N] (+bias) on the MXU, bf16 in / f32 acc.

    Returns (out [M,N], col_stats [2,N] f32) where col_stats[0] is the
    per-column sum and col_stats[1] the per-column sum of squares of the f32
    result — exactly what training-mode batch norm needs.
    """
    return _matmul(a, b, bias, out_dtype, with_stats=True)


def matmul_bias(a, b, bias=None, out_dtype=jnp.bfloat16):
    """Same matmul without the BN-stats epilogue (fc / final projector layer)."""
    return _matmul(a, b, bias, out_dtype, with_stats=False)


# ------------------- fused BN apply (+ReLU / +residual) ------------------

def bn_scale_shift(col_stats, m_rows, gamma, beta):
    """Fold training-mode BN (biased variance) into per-channel scale/shift."""
    mean = col_stats[0] / m_rows
    var = jnp.maximum(col_stats[1] / m_rows - mean * mean, 0.0)
    scale = gamma * jax.lax.rsqrt(var + BN_EPS)
    shift = beta - mean * scale
    return (scale.reshape(1, -1).astype(jnp.float32),
            shift.reshape(1, -1).astype(jnp.float32))


def _bn_act_kernel(x_ref, s_ref, t_ref, o_ref, *, relu):
    y = x_ref[...].astype(jnp.float32) * s_ref[...] + t_ref[...]
    if relu:
        y = jnp.maximum(y, 0.0)
    o_ref[...] = y.astype(o_ref.dtype)


def _bn_add_relu_kernel(x_ref, sx_ref, tx_ref, r_ref, sr_ref, tr_ref, o_ref):
    y = x_ref[...].astype(jnp.float32) * sx_ref[...] + tx_ref[...]
    z = r_ref[...].astype(jnp.float32) * sr_ref[...] + tr_ref[...]
    o_ref[...] = jnp.maximum(y + z, 0.0).astype(o_ref.dtype)


def _bn_addid_relu_kernel(x_ref, sx_ref, tx_ref, r_ref, o_ref):
    y = x_ref[...].astype(jnp.float32) * sx_ref[...] + tx_ref[...]
    o_ref[...] = jnp.maximum(y + r_ref[...].astype(jnp.float32), 0.0).astype(o_ref.dtype)


def _row_tile(M, C):
    cap = 1024 if C <= 256 else 512        # mem-bound: biggest tile that fits
    return M if M <= cap else cap


def bn_act(x2d, scale, shift, relu):
    """y = relu?(x * scale + shift), tiled over rows ('parallel' grid)."""
    M, C = x2d.shape
    rows = _row_tile(M, C)
    return pl.pallas_call(
        functools.partial(_bn_act_kernel, relu=relu),
        out_shape=jax.ShapeDtypeStruct((M, C), jnp.bfloat16),
        grid_spec=pltpu.PrefetchScalarGridSpec(
            num_scalar_prefetch=0,
            grid=(pl.cdiv(M, rows),),
            in_specs=[pl.BlockSpec((rows, C), lambda i: (i, 0)),
                      pl.BlockSpec((1, C), lambda i: (0, 0)),
                      pl.BlockSpec((1, C), lambda i: (0, 0))],
            out_specs=pl.BlockSpec((rows, C), lambda i: (i, 0)),
        ),
        compiler_params=pltpu.CompilerParams(
            dimension_semantics=("parallel",),
            vmem_limit_bytes=VMEM_LIMIT),
    )(x2d, scale, shift)


def bn_add_relu(x2d, sx, tx, r2d, sr, tr):
    """y = relu((x*sx+tx) + (r*sr+tr)) — fused bn2 + downsample-bn + residual."""
    M, C = x2d.shape
    rows = _row_tile(M, C)
    return pl.pallas_call(
        _bn_add_relu_kernel,
        out_shape=jax.ShapeDtypeStruct((M, C), jnp.bfloat16),
        grid_spec=pltpu.PrefetchScalarGridSpec(
            num_scalar_prefetch=0,
            grid=(pl.cdiv(M, rows),),
            in_specs=[pl.BlockSpec((rows, C), lambda i: (i, 0)),
                      pl.BlockSpec((1, C), lambda i: (0, 0)),
                      pl.BlockSpec((1, C), lambda i: (0, 0)),
                      pl.BlockSpec((rows, C), lambda i: (i, 0)),
                      pl.BlockSpec((1, C), lambda i: (0, 0)),
                      pl.BlockSpec((1, C), lambda i: (0, 0))],
            out_specs=pl.BlockSpec((rows, C), lambda i: (i, 0)),
        ),
        compiler_params=pltpu.CompilerParams(
            dimension_semantics=("parallel",),
            vmem_limit_bytes=VMEM_LIMIT),
    )(x2d, sx, tx, r2d, sr, tr)


def bn_add_relu_identity(x2d, sx, tx, r2d):
    """y = relu((x*sx+tx) + r) — fused bn2 + identity residual + ReLU."""
    M, C = x2d.shape
    rows = _row_tile(M, C)
    return pl.pallas_call(
        _bn_addid_relu_kernel,
        out_shape=jax.ShapeDtypeStruct((M, C), jnp.bfloat16),
        grid_spec=pltpu.PrefetchScalarGridSpec(
            num_scalar_prefetch=0,
            grid=(pl.cdiv(M, rows),),
            in_specs=[pl.BlockSpec((rows, C), lambda i: (i, 0)),
                      pl.BlockSpec((1, C), lambda i: (0, 0)),
                      pl.BlockSpec((1, C), lambda i: (0, 0)),
                      pl.BlockSpec((rows, C), lambda i: (i, 0))],
            out_specs=pl.BlockSpec((rows, C), lambda i: (i, 0)),
        ),
        compiler_params=pltpu.CompilerParams(
            dimension_semantics=("parallel",),
            vmem_limit_bytes=VMEM_LIMIT),
    )(x2d, sx, tx, r2d)


# -------------------- conv as im2col + Pallas matmul ---------------------

def conv2d(x_nhwc, w_oihw, stride, padding, bias=None):
    """Conv as bf16 im2col patches (or strided slice for 1x1) + MXU matmul."""
    N, H, W, Cin = x_nhwc.shape
    Cout, _, kh, kw = w_oihw.shape
    x_bf16 = x_nhwc.astype(jnp.bfloat16)
    if kh == 1 and kw == 1 and padding == 0:
        # 1x1 conv: a strided spatial subsample IS the im2col — skip the patch op.
        xs = x_bf16[:, ::stride, ::stride, :]
        Ho, Wo = xs.shape[1], xs.shape[2]
        a = xs.reshape(N * Ho * Wo, Cin)
        bmat = w_oihw.reshape(Cout, Cin).T
    else:
        # TODO(synk): fuse patch extraction into the matmul kernel (kh*kw shifted
        # accumulations) to remove the expanded intermediate entirely; for now the
        # patches are emitted in bf16 to halve that traffic vs an f32 path.
        patches = jax.lax.conv_general_dilated_patches(
            x_bf16, (kh, kw), (stride, stride),
            [(padding, padding), (padding, padding)],
            dimension_numbers=("NHWC", "HWIO", "NHWC"))
        Ho, Wo = patches.shape[1], patches.shape[2]
        a = patches.reshape(N * Ho * Wo, Cin * kh * kw)
        # patch feature order is (Cin, kh, kw) — matches the OIHW weight flatten
        bmat = w_oihw.reshape(Cout, Cin * kh * kw).T
    out, stats = matmul_bias_stats(a, bmat, bias=bias)
    return out.reshape(N, Ho, Wo, Cout), stats


# ------------------------------ the model -------------------------------

def basic_block(x, bp, stride):
    out, st1 = conv2d(x, bp["conv1"], stride, 1)
    N, H, W, C = out.shape
    M = N * H * W
    s1, t1 = bn_scale_shift(st1, M, bp["bn1_g"], bp["bn1_b"])
    out = bn_act(out.reshape(M, C), s1, t1, relu=True).reshape(N, H, W, C)

    out2, st2 = conv2d(out, bp["conv2"], 1, 1)
    s2, t2 = bn_scale_shift(st2, M, bp["bn2_g"], bp["bn2_b"])

    if "ds_conv" in bp:
        idn, st_ds = conv2d(x, bp["ds_conv"], stride, 0)
        sd, td = bn_scale_shift(st_ds, M, bp["ds_bn_g"], bp["ds_bn_b"])
        # fused tail: bn2 + downsample-bn + residual add + ReLU in one pass
        y = bn_add_relu(out2.reshape(M, C), s2, t2, idn.reshape(M, C), sd, td)
    else:
        # fused tail: bn2 + identity residual + ReLU (no dummy scale/shift work)
        y = bn_add_relu_identity(out2.reshape(M, C), s2, t2, x.reshape(M, C))
    return y.reshape(N, H, W, C)


def encoder_forward(x_nhwc, p):
    # conv1 replaced: Conv2d(3, 64, kernel_size=3, stride=1) -> padding=0, bias=True
    x, st = conv2d(x_nhwc, p["conv1"], stride=1, padding=0, bias=p["conv1_b"])
    N, H, W, C = x.shape
    s, t = bn_scale_shift(st, N * H * W, p["bn1_g"], p["bn1_b"])
    x = bn_act(x.reshape(-1, C), s, t, relu=True).reshape(N, H, W, C)
    # maxpool replaced by nn.Identity()
    for layer, stride0 in zip(p["layers"], LAYER_STRIDES):
        for bi, bp in enumerate(layer):
            x = basic_block(x, bp, stride0 if bi == 0 else 1)
    y = jnp.mean(x.astype(jnp.float32), axis=(1, 2))  # AdaptiveAvgPool2d + flatten (glue)
    return matmul_bias(y, p["fc_w"].T, p["fc_b"])      # no BN after fc -> no stats


def projector_forward(y, p):
    h = y
    for i in (1, 2, 3):
        h, st = matmul_bias_stats(h, p[f"w{i}"].T, p[f"b{i}"])
        s, t = bn_scale_shift(st, h.shape[0], p[f"g{i}"], p[f"beta{i}"])
        h = bn_act(h, s, t, relu=True)
    return matmul_bias(h, p["w4"].T, p["b4"], out_dtype=jnp.float32)


def vicreg_forward(params, x1_nchw, x2_nchw):
    x = jnp.concatenate([x1_nchw, x2_nchw], axis=0)            # torch.cat((x1, x2))
    x = jnp.transpose(x, (0, 2, 3, 1)).astype(jnp.bfloat16)    # NCHW -> NHWC, bf16
    y = encoder_forward(x, params["encoder"])
    z = projector_forward(y, params["projector"])
    z1, z2 = jnp.split(z, 2, axis=0)                           # .chunk(2)
    return z1, z2


# --------------------------- parameter init -----------------------------

def init_params(key, encoder_dim, projector_dim):
    keys = list(jax.random.split(key, 48))
    idx = [0]

    def nxt():
        k = keys[idx[0]]
        idx[0] += 1
        return k

    def conv_w(cout, cin, k):
        fan_in = cin * k * k
        return jax.random.normal(nxt(), (cout, cin, k, k), jnp.float32) * (2.0 / fan_in) ** 0.5

    def linear(cout, cin):
        lim = 1.0 / (cin ** 0.5)
        kw_, kb_ = jax.random.split(nxt())
        w = jax.random.uniform(kw_, (cout, cin), jnp.float32, minval=-lim, maxval=lim)
        b = jax.random.uniform(kb_, (cout,), jnp.float32, minval=-lim, maxval=lim)
        return w, b

    def bn(c):
        return jnp.ones((c,), jnp.float32), jnp.zeros((c,), jnp.float32)

    enc = {"conv1": conv_w(64, 3, 3)}
    lim1 = 1.0 / (3 * 3 * 3) ** 0.5
    enc["conv1_b"] = jax.random.uniform(nxt(), (64,), jnp.float32, minval=-lim1, maxval=lim1)
    enc["bn1_g"], enc["bn1_b"] = bn(64)
    layers = []
    inplanes = 64
    for planes, stride in zip((64, 128, 256, 512), LAYER_STRIDES):
        blocks = []
        for bi in range(2):
            s = stride if bi == 0 else 1
            bp = {"conv1": conv_w(planes, inplanes, 3),
                  "conv2": conv_w(planes, planes, 3)}
            bp["bn1_g"], bp["bn1_b"] = bn(planes)
            bp["bn2_g"], bp["bn2_b"] = bn(planes)
            if s != 1 or inplanes != planes:
                bp["ds_conv"] = conv_w(planes, inplanes, 1)
                bp["ds_bn_g"], bp["ds_bn_b"] = bn(planes)
            inplanes = planes
            blocks.append(bp)
        layers.append(blocks)
    enc["layers"] = layers
    enc["fc_w"], enc["fc_b"] = linear(encoder_dim, 512)

    proj = {}
    dims = [(projector_dim, encoder_dim)] + [(projector_dim, projector_dim)] * 3
    for i, (co, ci) in enumerate(dims, start=1):
        proj[f"w{i}"], proj[f"b{i}"] = linear(co, ci)
        if i < 4:
            proj[f"g{i}"], proj[f"beta{i}"] = bn(co)

    return {"encoder": enc, "projector": proj}


if __name__ == "__main__":
    encoder_dim, projector_dim = 32, 64
    key = jax.random.PRNGKey(0)
    kp, k1, k2, kc, kw = jax.random.split(key, 5)

    # one-off check: im2col patch channel ordering matches the OIHW weight flatten
    xc = jax.random.normal(kc, (1, 6, 6, 3), jnp.float32)
    wc = jax.random.normal(kw, (4, 3, 3, 3), jnp.float32) * 0.2
    ref = jax.lax.conv_general_dilated(
        xc, jnp.transpose(wc, (2, 3, 1, 0)), (1, 1), [(1, 1), (1, 1)],
        dimension_numbers=("NHWC", "HWIO", "NHWC"))
    got, _ = conv2d(xc, wc, stride=1, padding=1)
    assert jnp.allclose(got.astype(jnp.float32), ref, atol=0.1, rtol=0.1), \
        "im2col channel ordering mismatch"

    params = init_params(kp, encoder_dim, projector_dim)
    x1 = jax.random.normal(k1, (2, 3, 16, 16), jnp.float32)
    x2 = jax.random.normal(k2, (2, 3, 16, 16), jnp.float32)

    fwd = jax.jit(vicreg_forward)
    z1, z2 = fwd(params, x1, x2)
    jax.block_until_ready((z1, z2))
    assert z1.shape == (2, projector_dim) and z2.shape == (2, projector_dim)
    assert bool(jnp.all(jnp.isfinite(z1))) and bool(jnp.all(jnp.isfinite(z2)))
    print("KERNEL_OK")
</pallas_src>

<mosaic_0001>
module attributes {stable_mosaic.version = 11 : i64} {
  func.func @_mm_stats_kernel(%arg0: i32, %arg1: i32, %arg2: i32, %arg3: memref<36x27xbf16, #tpu.memory_space<vmem>>, %arg4: memref<27x4xbf16, #tpu.memory_space<vmem>>, %arg5: memref<1x4xf32, #tpu.memory_space<vmem>>, %arg6: memref<36x4xbf16, #tpu.memory_space<vmem>>, %arg7: memref<1x2x4xf32, #tpu.memory_space<vmem>>, %arg8: memref<36x4xf32, #tpu.memory_space<vmem>>) attributes {dimension_semantics = [#tpu.dimension_semantics<parallel>, #tpu.dimension_semantics<parallel>, #tpu.dimension_semantics<arbitrary>], iteration_bounds = array<i64: 1, 1, 1>, scalar_prefetch = 0 : i64, scratch_operands = 1 : i64, tpu.core_type = #tpu.core_type<tc>, window_params = [{transform_indices = @transform_0, window_bounds = array<i64: 36, 27>}, {transform_indices = @transform_1, window_bounds = array<i64: 27, 4>}, {transform_indices = @transform_2, window_bounds = array<i64: 1, 4>}, {transform_indices = @transform_3, window_bounds = array<i64: 36, 4>}, {transform_indices = @transform_4, window_bounds = array<i64: 1, 2, 4>}]} {
    %c0_i32 = arith.constant 0 : i32
    %0 = arith.cmpi eq, %arg2, %c0_i32 : i32
    %1 = arith.extui %0 : i1 to i32
    %c0_i32_0 = arith.constant 0 : i32
    %2 = arith.cmpi ne, %1, %c0_i32_0 : i32
    scf.if %2 {
      %c0_10 = arith.constant 0 : index
      %c0_11 = arith.constant 0 : index
      %12 = vector.load %arg5[%c0_10, %c0_11] : memref<1x4xf32, #tpu.memory_space<vmem>>, vector<1x4xf32>
      %13 = vector.shape_cast %12 : vector<1x4xf32> to vector<1x4xf32>
      %14 = vector.broadcast %13 : vector<1x4xf32> to vector<36x4xf32>
      %c0_12 = arith.constant 0 : index
      %c0_13 = arith.constant 0 : index
      %15 = vector.load %arg8[%c0_12, %c0_13] : memref<36x4xf32, #tpu.memory_space<vmem>>, vector<36x4xf32>
      tpu.vector_store %arg8[%c0_12, %c0_13], %14 {strides = array<i32>} : memref<36x4xf32, #tpu.memory_space<vmem>>, vector<36x4xf32>,
    } else {
    }
    %c0 = arith.constant 0 : index
    %c0_1 = arith.constant 0 : index
    %3 = vector.load %arg8[%c0, %c0_1] : memref<36x4xf32, #tpu.memory_space<vmem>>, vector<36x4xf32>
    %c0_2 = arith.constant 0 : index
    %c0_3 = arith.constant 0 : index
    %4 = vector.load %arg3[%c0_2, %c0_3] : memref<36x27xbf16, #tpu.memory_space<vmem>>, vector<36x27xbf16>
    %c0_4 = arith.constant 0 : index
    %c0_5 = arith.constant 0 : index
    %5 = vector.load %arg4[%c0_4, %c0_5] : memref<27x4xbf16, #tpu.memory_space<vmem>>, vector<27x4xbf16>
    %cst = arith.constant dense<0.000000e+00> : vector<36x4xf32>
    %6 = tpu.matmul %4, %5, %cst {dimension_numbers = #tpu.dot_dimension_numbers<[1], [0], [0], [1], [0, 0, 1, 1], [], []>} : vector<36x27xbf16>, vector<27x4xbf16>, vector<36x4xf32> -> vector<36x4xf32>
    %7 = arith.addf %3, %6 : vector<36x4xf32>
    %c0_6 = arith.constant 0 : index
    %c0_7 = arith.constant 0 : index
    %8 = vector.load %arg8[%c0_6, %c0_7] : memref<36x4xf32, #tpu.memory_space<vmem>>, vector<36x4xf32>
    tpu.vector_store %arg8[%c0_6, %c0_7], %7 {strides = array<i32>} : memref<36x4xf32, #tpu.memory_space<vmem>>, vector<36x4xf32>,
    %c0_i32_8 = arith.constant 0 : i32
    %9 = arith.cmpi eq, %arg2, %c0_i32_8 : i32
    %10 = arith.extui %9 : i1 to i32
    %c0_i32_9 = arith.constant 0 : i32
    %11 = arith.cmpi ne, %10, %c0_i32_9 : i32
    scf.if %11 {
      %c0_10 = arith.constant 0 : index
      %c0_11 = arith.constant 0 : index
      %12 = vector.load %arg8[%c0_10, %c0_11] : memref<36x4xf32, #tpu.memory_space<vmem>>, vector<36x4xf32>
      %13 = arith.truncf %12 : vector<36x4xf32> to vector<36x4xbf16>
      %c0_12 = arith.constant 0 : index
      %c0_13 = arith.constant 0 : index
      %14 = vector.load %arg6[%c0_12, %c0_13] : memref<36x4xbf16, #tpu.memory_space<vmem>>, vector<36x4xbf16>
      tpu.vector_store %arg6[%c0_12, %c0_13], %13 {strides = array<i32>} : memref<36x4xbf16, #tpu.memory_space<vmem>>, vector<36x4xbf16>,
      %15 = tpu.iota {dimensions = array<i32: 0>} : vector<36x4xi32>
      %c36_i32 = arith.constant 36 : i32
      %16 = arith.muli %arg0, %c36_i32 : i32
      %17 = vector.broadcast %16 : i32 to vector<36x4xi32>
      %18 = arith.addi %15, %17 : vector<36x4xi32>
      %c36_i32_14 = arith.constant 36 : i32
      %19 = vector.broadcast %c36_i32_14 : i32 to vector<36x4xi32>
      %20 = arith.cmpi slt, %18, %19 : vector<36x4xi32>
      %cst_15 = arith.constant 0.000000e+00 : f32
      %21 = vector.broadcast %cst_15 : f32 to vector<36x4xf32>
      %22 = arith.select %20, %12, %21 : vector<36x4xi1>, vector<36x4xf32>
      %cst_16 = arith.constant dense<0.000000e+00> : vector<4xf32>
      %23 = vector.multi_reduction <add>, %22, %cst_16 [0] : vector<36x4xf32> to vector<4xf32>
      %24 = vector.shape_cast %23 : vector<4xf32> to vector<1x4xf32>
      %25 = arith.mulf %22, %22 : vector<36x4xf32>
      %cst_17 = arith.constant dense<0.000000e+00> : vector<4xf32>
      %26 = vector.multi_reduction <add>, %25, %cst_17 [0] : vector<36x4xf32> to vector<4xf32>
      %27 = vector.shape_cast %26 : vector<4xf32> to vector<1x4xf32>
      %28 = tpu.concatenate %24, %27 in 0 : vector<1x4xf32>, vector<1x4xf32> -> vector<2x4xf32>
      %29 = vector.shape_cast %28 : vector<2x4xf32> to vector<1x2x4xf32>
      %c0_18 = arith.constant 0 : index
      %c0_19 = arith.constant 0 : index
      %c0_20 = arith.constant 0 : index
      %30 = vector.load %arg7[%c0_18, %c0_19, %c0_20] : memref<1x2x4xf32, #tpu.memory_space<vmem>>, vector<1x2x4xf32>
      tpu.vector_store %arg7[%c0_18, %c0_19, %c0_20], %29 {strides = array<i32>} : memref<1x2x4xf32, #tpu.memory_space<vmem>>, vector<1x2x4xf32>,
    } else {
    }
    return
  }
  func.func @transform_0(%arg0: i32, %arg1: i32, %arg2: i32) -> (i32, i32) {
    %c0_i32 = arith.constant 0 : i32
    return %arg0, %arg2 : i32, i32
  }
  func.func @transform_1(%arg0: i32, %arg1: i32, %arg2: i32) -> (i32, i32) {
    %c0_i32 = arith.constant 0 : i32
    return %arg2, %arg1 : i32, i32
  }
  func.func @transform_2(%arg0: i32, %arg1: i32, %arg2: i32) -> (i32, i32) {
    %c0_i32 = arith.constant 0 : i32
    %c0_i32_0 = arith.constant 0 : i32
    return %c0_i32, %arg1 : i32, i32
  }
  func.func @transform_3(%arg0: i32, %arg1: i32, %arg2: i32) -> (i32, i32) {
    %c0_i32 = arith.constant 0 : i32
    return %arg0, %arg1 : i32, i32
  }
  func.func @transform_4(%arg0: i32, %arg1: i32, %arg2: i32) -> (i32, i32, i32) {
    %c0_i32 = arith.constant 0 : i32
    %c0_i32_0 = arith.constant 0 : i32
    return %arg0, %c0_i32, %arg1 : i32, i32, i32
  }
}

</mosaic_0001>

<llo_original>
// kernel: tpu_custom_call.1
$region0: #{tpu_custom_call.1}
  #allocation0 [shape = 'u32[]', space=smem, size = 0x4, offset = 0x4, fixed_abs, tag = 'smem constant byte address 0x4 - core index']
  #allocation1 [shape = 'u32[144,128]{1,0:T(1,128)}', space=vmem, size = 0x12000, scoped, tag = 'internal scratch']
  #allocation2 [shape = 'f32[36,4]{1,0:T(8,128)}', space=vmem, size = 0x5000, scoped, tag = 'scratch operand']
  %s0 = inlined_call_operand.vmem [shape: bf16[36,27], index: 0, kind: input, shape index: {}]
  %s1 = inlined_call_operand.vmem [shape: bf16[27,4], index: 1, kind: input, shape index: {}]
  %s2 = inlined_call_operand.vmem [shape: f32[1,4], index: 2, kind: input, shape index: {}]
  %s3 = inlined_call_operand.vmem [shape: bf16[36,4], index: 3, kind: output, shape index: {0}]
  %s4 = inlined_call_operand.hbm [shape: f32[1,2,4], index: 4, kind: output, shape index: {1}]
  %5 = xla_tuple %s3, %s4
  %s6 = sld [smem:[#allocation0]]
  $region38: #{tpu_custom_call.1} parent=0
    _
  %s8 = ssub.s32 1, %s6
  %s9 = scalar_select 0, %s8, %s6
  $region1: #{tpu_custom_call.1} parent=0
    #allocation3 [shape = 'u8[1024]{0}', space=vmem, size = 0x400, scoped, tag = 'output window, operand 1, single buffered']
    #allocation4 [shape = 's32[1]{0}', space=sflag, size = 0x4, scoped, tag = 'scoped memory for tpu_custom_call.1']
    %10 = vsyncpa [#allocation4], 0
    // Predicated region
    $region2: #{tpu_custom_call.1} parent=1 // pred_check
      _
    $region3: #{tpu_custom_call.1} parent=1 // pred_check_branch
      %12 = sbr.rel (0) target = $region5
    $region4: #{tpu_custom_call.1} parent=1 // pred_region
      _
    $region5: #{tpu_custom_call.1} parent=1 // pred_fallthru
      _
    // Predicated region
    $region6: #{tpu_custom_call.1} parent=1 // pred_check
      _
    $region7: #{tpu_custom_call.1} parent=1 // pred_check_branch
      %14 = sbr.rel (0) target = $region9
    $region8: #{tpu_custom_call.1} parent=1 // pred_region
      _
    $region9: #{tpu_custom_call.1} parent=1 // pred_fallthru
      _
    // Predicated region
    $region10: #{tpu_custom_call.1} parent=1 // pred_check
      _
    $region11: #{tpu_custom_call.1} parent=1 // pred_check_branch
      %16 = sbr.rel (0) target = $region13
    $region12: #{tpu_custom_call.1} parent=1 // pred_region
      _
    $region13: #{tpu_custom_call.1} parent=1 // pred_fallthru
      _
    %p18 = scmp.eq.s32.totalorder 0, 0
    // Predicated region
    $region14: #{tpu_custom_call.1} parent=1 // pred_check
      %p19 = pneg %p18
    $region15: #{tpu_custom_call.1} parent=1 // pred_check_branch
      %21 = sbr.rel (%p19) target = $region17
    $region16: #{tpu_custom_call.1} parent=1 // pred_region
      %v22 = vld [vmem:[%s2] sm:$0x1]
      %v24 = vlaneseq
      %v25 = vshrl.u32 %v24, 7
      %v26 = vsub.s32 0, %v25
      %v27 = vrot.slane %v22, %v26
      %vm29 = vcmask 31744
      %30 = vst.msk [vmem:[#allocation2] sm:$0xff] %vm29, %v27
      %31 = vst.msk [vmem:[#allocation2 + $0x8] sm:$0xff] %vm29, %v27
      %32 = vst.msk [vmem:[#allocation2 + $0x10] sm:$0xff] %vm29, %v27
      %33 = vst.msk [vmem:[#allocation2 + $0x18] sm:$0xff] %vm29, %v27
      %vm34 = vcmask 27648
      %35 = vst.msk [vmem:[#allocation2 + $0x20] sm:$0xf] %vm34, %v27
    $region17: #{tpu_custom_call.1} parent=1 // pred_fallthru
      _
    %v36 = vld [vmem:[#allocation2] sm:$0xff]
    %v37 = vld [vmem:[#allocation2 + $0x8] sm:$0xff]
    %v38 = vld [vmem:[#allocation2 + $0x10] sm:$0xff]
    %v39 = vld [vmem:[#allocation2 + $0x18] sm:$0xff]
    %v40 = vld [vmem:[#allocation2 + $0x20] sm:$0xf]
    %v41 = vld [vmem:[%s0] sm:$0xf]
    %v42 = vld [vmem:[%s0 + $0x4] sm:$0xf]
    %v43 = vld [vmem:[%s0 + $0x8] sm:$0xf]
    %v44 = vld [vmem:[%s0 + $0xc] sm:$0xf]
    %v45 = vld [vmem:[%s0 + $0x10] sm:$0x3]
    %v46 = vld [vmem:[%s1] sm:$0xf]
    %v47 = vld [vmem:[%s1 + $0x4] sm:$0xf]
    %v48 = vld [vmem:[%s1 + $0x8] sm:$0xf]
    %v49 = vld [vmem:[%s1 + $0xc] sm:$0x3]
    %v55 = vunpack.c.l.b16 %v41
    %v56 = vunpack.c.l.b16 %v42
    %v57 = vunpack.c.l.b16 %v43
    %v58 = vunpack.c.l.b16 %v44
    %v59 = vunpack.c.l.b16 %v45
    %v60 = vpack.c.b16 %v56, %v55
    %v61 = vpack.c.b16 %v58, %v57
    %v62 = vpack.c.b16 %v59, %v59
    %v67 = vunpack.c.l.b16 %v46
    %v68 = vunpack.c.l.b16 %v47
    %v69 = vunpack.c.l.b16 %v48
    %v70 = vunpack.c.l.b16 %v49
    %v71 = vpack.c.b16 %v68, %v67
    %v72 = vpack.c.b16 %v70, %v69
    %vm74 = vcmask 220160
    %v76 = vsel %vm74, %v60, 0
    %v79 = vsel %vm74, %v61, 0
    %v82 = vsel %vm74, %v62, 0
    %vm84 = vcmask 1044480
    %vm85 = vcmask 1045504
    %v86 = vsel %vm84, 4294967295, 65535
    %v87 = vsel %vm85, %v86, 0
    %v89 = vand.u32 %v72, %v87
    %91 = vmatprep.subr.bf16.mxu0 0
    %92 = vmatpush1.bf16.msra.mxu0 %v71
    %93 = vmatprep.subr.bf16.mxu0 0
    %94 = vmatpush1.bf16.msra.mxu0 %v89
    %95 = vmatprep.subr.bf16.mxu0 0
    %96 = vmatpush1.bf16.msra.mxu0 0
    %97 = vmatprep.subr.bf16.mxu0 0
    %98 = vmatpush1.bf16.msra.mxu0 0
    %99 = vmatprep.subr.bf16.mxu0 0
    %100 = vmatpush1.bf16.msra.mxu0 0
    %101 = vmatprep.subr.bf16.mxu0 0
    %102 = vmatpush1.bf16.msra.mxu0 0
    %103 = vmatprep.subr.bf16.mxu0 0
    %104 = vmatpush1.bf16.msra.mxu0 0
    %105 = vmatprep.subr.bf16.mxu0 0
    %106 = vmatpush1.bf16.msra.mxu0 0
    %107 = vmatprep.subr.bf16.mxu0 0
    %108 = vmatpush1.bf16.msra.mxu0 0
    %109 = vmatprep.subr.bf16.mxu0 0
    %110 = vmatpush1.bf16.msra.mxu0 0
    %111 = vmatprep.subr.bf16.mxu0 0
    %112 = vmatpush1.bf16.msra.mxu0 0
    %113 = vmatprep.subr.bf16.mxu0 0
    %114 = vmatpush1.bf16.msra.mxu0 0
    %115 = vmatprep.subr.bf16.mxu0 0
    %116 = vmatpush1.bf16.msra.mxu0 0
    %117 = vmatprep.subr.bf16.mxu0 0
    %118 = vmatpush1.bf16.msra.mxu0 0
    %119 = vmatprep.subr.bf16.mxu0 0
    %120 = vmatpush1.bf16.msra.mxu0 0
    %121 = vmatprep.subr.bf16.mxu0 0
    %122 = vmatpush1.bf16.msra.mxu0 0
    %123 = vmatprep.mubr.bf16.mxu0 0
    %124 = vmatmul.mubr.bf16.gmra.mrb[0].mxu0 %v76
    %v125 = vpop.f32.mrb[0].mxu0
    %v126 = vadd.f32 0.0, %v125
    %v127 = vpop.f32.mrb[0].mxu0
    %v128 = vpop.f32.mrb[0].mxu0
    %v129 = vadd.f32 0.0, %v128
    %v130 = vpop.f32.mrb[0].mxu0
    %131 = vmatprep.mubr.bf16.mxu0 0
    %132 = vmatmul.mubr.bf16.gmra.mrb[0].mxu0 %v79
    %v133 = vpop.f32.mrb[0].mxu0
    %v134 = vadd.f32 0.0, %v133
    %v135 = vpop.f32.mrb[0].mxu0
    %v136 = vpop.f32.mrb[0].mxu0
    %v137 = vadd.f32 0.0, %v136
    %v138 = vpop.f32.mrb[0].mxu0
    %139 = vmatprep.mubr.bf16.mxu0 0
    %140 = vmatmul.mubr.bf16.gmra.mrb[0].mxu0 %v82
    %v141 = vpop.f32.mrb[0].mxu0
    %v142 = vadd.f32 0.0, %v141
    %v143 = vpop.f32.mrb[0].mxu0
    %v144 = vpop.f32.mrb[0].mxu0
    %v145 = vpop.f32.mrb[0].mxu0
    %146 = vdwg.mxu0
    %v147 = vadd.f32 %v36, %v126
    %v148 = vadd.f32 %v37, %v129
    %v149 = vadd.f32 %v38, %v134
    %v150 = vadd.f32 %v39, %v137
    %v151 = vadd.f32 %v40, %v142
    %vm152 = vcmask 31744
    %153 = vst.msk [vmem:[#allocation2] sm:$0xff] %vm152, %v147
    %154 = vst.msk [vmem:[#allocation2 + $0x8] sm:$0xff] %vm152, %v148
    %155 = vst.msk [vmem:[#allocation2 + $0x10] sm:$0xff] %vm152, %v149
    %156 = vst.msk [vmem:[#allocation2 + $0x18] sm:$0xff] %vm152, %v150
    %vm157 = vcmask 27648
    %158 = vst.msk [vmem:[#allocation2 + $0x20] sm:$0xf] %vm157, %v151
    // Predicated region
    $region18: #{tpu_custom_call.1} parent=1 // pred_check
      %p159 = pneg %p18
    $region19: #{tpu_custom_call.1} parent=1 // pred_check_branch
      %161 = sbr.rel (%p159) target = $region21
    $region20: #{tpu_custom_call.1} parent=1 // pred_region
      %v162 = vld [vmem:[#allocation2] sm:$0xff]
      %v163 = vld [vmem:[#allocation2 + $0x8] sm:$0xff]
      %v164 = vld [vmem:[#allocation2 + $0x10] sm:$0xff]
      %v165 = vld [vmem:[#allocation2 + $0x18] sm:$0xff]
      %v166 = vld [vmem:[#allocation2 + $0x20] sm:$0xf]
      %v167 = vpack.c.bf16 %v163, %v162
      %v168 = vpack.c.bf16 %v165, %v164
      %v169 = vpack.c.bf16 %v166, %v166
      %v173 = vunpack.c.l.b16 %v167
      %v174 = vunpack.c.h.b16 %v167
      %v175 = vunpack.c.l.b16 %v168
      %v176 = vunpack.c.h.b16 %v168
      %v177 = vunpack.c.l.b16 %v169
      %v178 = vpack.c.b16 %v173, %v173
      %v179 = vpack.c.b16 %v174, %v174
      %v180 = vpack.c.b16 %v175, %v175
      %v181 = vpack.c.b16 %v176, %v176
      %v182 = vpack.c.b16 %v177, %v177
      %188 = vst.msk [vmem:[%s3] sm:$0xf] %vm157, %v178
      %189 = vst.msk [vmem:[%s3 + $0x4] sm:$0xf] %vm157, %v179
      %190 = vst.msk [vmem:[%s3 + $0x8] sm:$0xf] %vm157, %v180
      %191 = vst.msk [vmem:[%s3 + $0xc] sm:$0xf] %vm157, %v181
      %vm192 = vcmask 25600
      %193 = vst.msk [vmem:[%s3 + $0x10] sm:$0x3] %vm192, %v182
      %v194 = vlaneseq
      %v195 = vshrl.u32 %v194, 7
      %v196 = vadd.s32 %v195, 8
      %v197 = vadd.s32 %v195, 16
      %v198 = vadd.s32 %v195, 24
      %v199 = vadd.s32 %v195, 32
      %s200 = smul.u32 0, 36
      %v201 = vstv %s200
      %v202 = vadd.s32 %v195, %v201
      %v203 = vadd.s32 %v196, %v201
      %v204 = vadd.s32 %v197, %v201
      %v205 = vadd.s32 %v198, %v201
      %v206 = vadd.s32 %v199, %v201
      %vm207 = vcmp.lt.s32.totalorder %v202, 36
      %vm208 = vcmp.lt.s32.totalorder %v203, 36
      %vm209 = vcmp.lt.s32.totalorder %v204, 36
      %vm210 = vcmp.lt.s32.totalorder %v205, 36
      %vm211 = vcmp.lt.s32.totalorder %v206, 36
      %v212 = vsel %vm207, %v162, 0.0
      %v213 = vsel %vm208, %v163, 0.0
      %v214 = vsel %vm209, %v164, 0.0
      %v215 = vsel %vm210, %v165, 0.0
      %v216 = vsel %vm211, %v166, 0.0
      %v217 = vsel %vm152, %v212, 0.0
      %v218 = vsel %vm152, %v213, 0.0
      %v219 = vadd.f32 %v217, %v218
      %v220 = vsel %vm152, %v214, 0.0
      %v221 = vadd.f32 %v219, %v220
      %v222 = vsel %vm152, %v215, 0.0
      %v223 = vadd.f32 %v221, %v222
      %v224 = vsel %vm157, %v216, 0.0
      %v225 = vadd.f32 %v223, %v224
      %v226 = vrot.slane %v225, 4
      %v227 = vadd.f32 %v225, %v226
      %v228 = vrot.slane %v227, 2
      %v229 = vadd.f32 %v227, %v228
      %v230 = vrot.slane %v229, 1
      %v231 = vadd.f32 %v229, %v230
      %v232 = vmul.f32 %v212, %v212
      %v233 = vmul.f32 %v213, %v213
      %v234 = vmul.f32 %v214, %v214
      %v235 = vmul.f32 %v215, %v215
      %v236 = vmul.f32 %v216, %v216
      %v237 = vsel %vm152, %v232, 0.0
      %v238 = vsel %vm152, %v233, 0.0
      %v239 = vadd.f32 %v237, %v238
      %v240 = vsel %vm152, %v234, 0.0
      %v241 = vadd.f32 %v239, %v240
      %v242 = vsel %vm152, %v235, 0.0
      %v243 = vadd.f32 %v241, %v242
      %v244 = vsel %vm157, %v236, 0.0
      %v245 = vadd.f32 %v243, %v244
      %v246 = vrot.slane %v245, 4
      %v247 = vadd.f32 %v245, %v246
      %v248 = vrot.slane %v247, 2
      %v249 = vadd.f32 %v247, %v248
      %v250 = vrot.slane %v249, 1
      %v251 = vadd.f32 %v249, %v250
      %vm252 = vcmask 1040384
      %v253 = vsel %vm252, %v231, %v251
      %254 = vst.msk [vmem:[#allocation3] sm:$0x3] %vm192, %v253
    $region21: #{tpu_custom_call.1} parent=1 // pred_fallthru
      _
    // Predicated region
    $region22: #{tpu_custom_call.1} parent=1 // pred_check
      _
    $region23: #{tpu_custom_call.1} parent=1 // pred_check_branch
      %256 = sbr.rel (0) target = $region25
    $region24: #{tpu_custom_call.1} parent=1 // pred_region
      _
    $region25: #{tpu_custom_call.1} parent=1 // pred_fallthru
      _
    // Predicated region
    $region26: #{tpu_custom_call.1} parent=1 // pred_check
      _
    $region27: #{tpu_custom_call.1} parent=1 // pred_check_branch
      %258 = sbr.rel (0) target = $region29
    $region28: #{tpu_custom_call.1} parent=1 // pred_region
      %s260 = ssub.s32 32, 32
      %261 = vsyncadd [#allocation4], %s260
      %s263 = sshll.u32 [#allocation3], 4
      %s264 = int_to_ptr.vmem [resolvable:$true] %s263
      %266 = dma.vmem_to_hbm [thread:$0]  %s264, 32, %s4, [#allocation4]
    $region29: #{tpu_custom_call.1} parent=1 // pred_fallthru
      _
    // Predicated region
    $region30: #{tpu_custom_call.1} parent=1 // pred_check
      _
    $region31: #{tpu_custom_call.1} parent=1 // pred_check_branch
      %268 = sbr.rel (0) target = $region33
    $region32: #{tpu_custom_call.1} parent=1 // pred_region
      _
    $region33: #{tpu_custom_call.1} parent=1 // pred_fallthru
      _
    // Predicated region
    $region34: #{tpu_custom_call.1} parent=1 // pred_check
      _
    $region35: #{tpu_custom_call.1} parent=1 // pred_check_branch
      %270 = sbr.rel (0) target = $region37
    $region36: #{tpu_custom_call.1} parent=1 // pred_region
      %271 = dma.done [#allocation4], 32
    $region37: #{tpu_custom_call.1} parent=1 // pred_fallthru
      _
    %272 = vsyncpa [#allocation4], 1

</llo_original>
